<compile_context>
chip_gen: v7x
topology: tpu7x:2x2x1
jax: 0.10.0
libtpu: 0.0.40
codegen_flags: <defaults>
</compile_context>

<pallas_src>
import functools

import jax
import jax.numpy as jnp
from jax.experimental import pallas as pl
from jax.experimental.pallas import tpu as pltpu


def _pick_batch_tile(B):
    """Largest batch tile (multiple of 8, up to 256) that divides B."""
    for tb in (256, 128, 64, 32, 16, 8):
        if B % tb == 0:
            return tb
    return B  # tiny / odd batch: single tile equal to the full array dim


def rbm_kernel(v_ref, wt_ref, w_ref, hb_ref, vb_ref, uh_ref, uv_ref,
               vout_ref, *, k):
    TB, NV = v_ref.shape
    NH = w_ref.shape[0]

    v0 = v_ref[...]          # (TB, NV) bf16
    Wt = wt_ref[...]         # (NV, NH) bf16  (= W.T, for v -> h)
    W = w_ref[...]           # (NH, NV) bf16  (for h -> v)

    # Hoisted bias broadcasts (JAX does not CSE broadcast_in_dim; the k-loop
    # below is unrolled, so doing this inside would re-emit it 2k+1 times).
    hb = jnp.broadcast_to(hb_ref[...], (TB, NH))   # f32
    vb = jnp.broadcast_to(vb_ref[...], (TB, NV))   # f32

    def _sigmoid(x):
        # Exact identity sigmoid(x) = 0.5*(tanh(x/2)+1); tanh runs on the EUP,
        # avoiding a full-tile VALU divide every half-step.
        return 0.5 * (jnp.tanh(0.5 * x) + 1.0)

    def _sample(p, u):
        # relu(sign(p - u)) == 1.0 where p > u else 0.0.  0/1 is exactly
        # representable in bf16, so feed it straight back into the MXU.
        return jnp.where(p > u, 1.0, 0.0).astype(jnp.bfloat16)

    def v_to_h(v_b16, u):
        s = jnp.dot(v_b16, Wt, preferred_element_type=jnp.float32) + hb
        return _sample(_sigmoid(s), u)

    def h_to_v(h_b16, u):
        s = jnp.dot(h_b16, W, preferred_element_type=jnp.float32) + vb
        return _sample(_sigmoid(s), u)

    h = v_to_h(v0, uh_ref[0])
    v_ = v0
    # k is a small static Python int; unrolled at trace time.
    # TODO(synk): switch to lax.fori_loop carrying (h,) if k or TB grows large.
    for i in range(k):
        v_ = h_to_v(h, uv_ref[i])
        h = v_to_h(v_, uh_ref[i + 1])

    vout_ref[...] = v_.astype(vout_ref.dtype)


def rbm_forward(v, W, h_bias, v_bias, *, k=5, key=None):
    """Returns (v, v_) exactly like RBM.forward (v_ is the 0/1 sample)."""
    assert k >= 1
    if key is None:
        key = jax.random.PRNGKey(0)

    B, NV = v.shape
    NH = W.shape[0]
    TB = _pick_batch_tile(B)
    grid = (B // TB,)

    # Precomputed uniforms: one draw per Bernoulli sample of the Gibbs chain.
    k_h, k_v = jax.random.split(key)
    u_h = jax.random.uniform(k_h, (k + 1, B, NH), dtype=jnp.float32)
    u_v = jax.random.uniform(k_v, (k, B, NV), dtype=jnp.float32)

    # bf16 operands for the MXU; W.T materialized once here.
    v_bf = v.astype(jnp.bfloat16)
    w_bf = W.astype(jnp.bfloat16)          # (NH, NV)
    wt_bf = W.T.astype(jnp.bfloat16)       # (NV, NH)
    hb2 = h_bias.reshape(1, NH).astype(jnp.float32)
    vb2 = v_bias.reshape(1, NV).astype(jnp.float32)

    v_out = pl.pallas_call(
        functools.partial(rbm_kernel, k=k),
        out_shape=jax.ShapeDtypeStruct((B, NV), jnp.float32),
        grid=grid,
        in_specs=[
            pl.BlockSpec((TB, NV), lambda b: (b, 0)),        # v tile
            pl.BlockSpec((NV, NH), lambda b: (0, 0)),        # W.T (full)
            pl.BlockSpec((NH, NV), lambda b: (0, 0)),        # W   (full)
            pl.BlockSpec((1, NH), lambda b: (0, 0)),         # h_bias
            pl.BlockSpec((1, NV), lambda b: (0, 0)),         # v_bias
            pl.BlockSpec((k + 1, TB, NH), lambda b: (0, b, 0)),  # uniforms (h)
            pl.BlockSpec((k, TB, NV), lambda b: (0, b, 0)),      # uniforms (v)
        ],
        out_specs=pl.BlockSpec((TB, NV), lambda b: (b, 0)),
        compiler_params=pltpu.CompilerParams(
            dimension_semantics=("parallel",)),
    )(v_bf, wt_bf, w_bf, hb2, vb2, u_h, u_v)

    return v, v_out


if __name__ == "__main__":
    # Small shapes consistent with the module (n_vis, n_hin scaled down).
    B, N_VIS, N_HIN, K = 8, 256, 128, 5

    key = jax.random.PRNGKey(0)
    k_w, k_v, k_chain = jax.random.split(key, 3)

    # Deterministic parameter init mirroring __init__:
    #   W = randn(n_hin, n_vis) * 0.01 ; biases = zeros
    W = jax.random.normal(k_w, (N_HIN, N_VIS), dtype=jnp.float32) * 0.01
    v_bias = jnp.zeros((N_VIS,), dtype=jnp.float32)
    h_bias = jnp.zeros((N_HIN,), dtype=jnp.float32)

    # Binarized visible input (MNIST-like).
    v = (jax.random.uniform(k_v, (B, N_VIS)) > 0.5).astype(jnp.float32)

    v_in, v_sample = rbm_forward(v, W, h_bias, v_bias, k=K, key=k_chain)
    jax.block_until_ready(v_sample)

    assert v_in.shape == (B, N_VIS) and v_sample.shape == (B, N_VIS)
    assert bool(jnp.all((v_sample == 0.0) | (v_sample == 1.0)))
    print("KERNEL_OK")
</pallas_src>

<mosaic_0001>
module attributes {stable_mosaic.version = 11 : i64} {
  func.func @rbm_kernel(%arg0: i32, %arg1: memref<8x256xbf16, #tpu.memory_space<vmem>>, %arg2: memref<256x128xbf16, #tpu.memory_space<vmem>>, %arg3: memref<128x256xbf16, #tpu.memory_space<vmem>>, %arg4: memref<1x128xf32, #tpu.memory_space<vmem>>, %arg5: memref<1x256xf32, #tpu.memory_space<vmem>>, %arg6: memref<6x8x128xf32, #tpu.memory_space<vmem>>, %arg7: memref<5x8x256xf32, #tpu.memory_space<vmem>>, %arg8: memref<8x256xf32, #tpu.memory_space<vmem>>) attributes {dimension_semantics = [#tpu.dimension_semantics<parallel>], iteration_bounds = array<i64: 1>, scalar_prefetch = 0 : i64, scratch_operands = 0 : i64, tpu.core_type = #tpu.core_type<tc>, window_params = [{transform_indices = @transform_0, window_bounds = array<i64: 8, 256>}, {pipeline_mode = #tpu.pipeline_mode<synchronous>, transform_indices = @transform_1, window_bounds = array<i64: 256, 128>}, {pipeline_mode = #tpu.pipeline_mode<synchronous>, transform_indices = @transform_2, window_bounds = array<i64: 128, 256>}, {pipeline_mode = #tpu.pipeline_mode<synchronous>, transform_indices = @transform_3, window_bounds = array<i64: 1, 128>}, {pipeline_mode = #tpu.pipeline_mode<synchronous>, transform_indices = @transform_4, window_bounds = array<i64: 1, 256>}, {transform_indices = @transform_5, window_bounds = array<i64: 6, 8, 128>}, {transform_indices = @transform_6, window_bounds = array<i64: 5, 8, 256>}, {transform_indices = @transform_7, window_bounds = array<i64: 8, 256>}]} {
    %c0 = arith.constant 0 : index
    %c0_0 = arith.constant 0 : index
    %0 = vector.load %arg1[%c0, %c0_0] : memref<8x256xbf16, #tpu.memory_space<vmem>>, vector<8x256xbf16>
    %c0_1 = arith.constant 0 : index
    %c0_2 = arith.constant 0 : index
    %1 = vector.load %arg2[%c0_1, %c0_2] : memref<256x128xbf16, #tpu.memory_space<vmem>>, vector<256x128xbf16>
    %c0_3 = arith.constant 0 : index
    %c0_4 = arith.constant 0 : index
    %2 = vector.load %arg3[%c0_3, %c0_4] : memref<128x256xbf16, #tpu.memory_space<vmem>>, vector<128x256xbf16>
    %c0_5 = arith.constant 0 : index
    %c0_6 = arith.constant 0 : index
    %3 = vector.load %arg4[%c0_5, %c0_6] : memref<1x128xf32, #tpu.memory_space<vmem>>, vector<1x128xf32>
    %4 = vector.shape_cast %3 : vector<1x128xf32> to vector<1x128xf32>
    %5 = vector.broadcast %4 : vector<1x128xf32> to vector<8x128xf32>
    %c0_7 = arith.constant 0 : index
    %c0_8 = arith.constant 0 : index
    %6 = vector.load %arg5[%c0_7, %c0_8] : memref<1x256xf32, #tpu.memory_space<vmem>>, vector<1x256xf32>
    %7 = vector.shape_cast %6 : vector<1x256xf32> to vector<1x256xf32>
    %8 = vector.broadcast %7 : vector<1x256xf32> to vector<8x256xf32>
    %c0_9 = arith.constant 0 : index
    %c0_10 = arith.constant 0 : index
    %c0_11 = arith.constant 0 : index
    %9 = vector.load %arg6[%c0_9, %c0_10, %c0_11] : memref<6x8x128xf32, #tpu.memory_space<vmem>>, vector<1x8x128xf32>
    %10 = vector.shape_cast %9 : vector<1x8x128xf32> to vector<8x128xf32>
    %cst = arith.constant dense<0.000000e+00> : vector<8x128xf32>
    %11 = tpu.matmul %0, %1, %cst {dimension_numbers = #tpu.dot_dimension_numbers<[1], [0], [0], [1], [0, 0, 1, 1], [], []>} : vector<8x256xbf16>, vector<256x128xbf16>, vector<8x128xf32> -> vector<8x128xf32>
    %12 = arith.addf %11, %5 : vector<8x128xf32>
    %cst_12 = arith.constant 5.000000e-01 : f32
    %13 = vector.broadcast %cst_12 : f32 to vector<8x128xf32>
    %14 = arith.mulf %13, %12 : vector<8x128xf32>
    %15 = math.tanh %14 : vector<8x128xf32>
    %cst_13 = arith.constant 1.000000e+00 : f32
    %16 = vector.broadcast %cst_13 : f32 to vector<8x128xf32>
    %17 = arith.addf %15, %16 : vector<8x128xf32>
    %cst_14 = arith.constant 5.000000e-01 : f32
    %18 = vector.broadcast %cst_14 : f32 to vector<8x128xf32>
    %19 = arith.mulf %18, %17 : vector<8x128xf32>
    %20 = arith.cmpf ogt, %19, %10 : vector<8x128xf32>
    %cst_15 = arith.constant 1.000000e+00 : f32
    %cst_16 = arith.constant 0.000000e+00 : f32
    %21 = vector.broadcast %cst_15 : f32 to vector<8x128xf32>
    %22 = vector.broadcast %cst_16 : f32 to vector<8x128xf32>
    %23 = arith.select %20, %21, %22 : vector<8x128xi1>, vector<8x128xf32>
    %24 = arith.truncf %23 : vector<8x128xf32> to vector<8x128xbf16>
    %c0_17 = arith.constant 0 : index
    %c0_18 = arith.constant 0 : index
    %c0_19 = arith.constant 0 : index
    %25 = vector.load %arg7[%c0_17, %c0_18, %c0_19] : memref<5x8x256xf32, #tpu.memory_space<vmem>>, vector<1x8x256xf32>
    %26 = vector.shape_cast %25 : vector<1x8x256xf32> to vector<8x256xf32>
    %cst_20 = arith.constant dense<0.000000e+00> : vector<8x256xf32>
    %27 = tpu.matmul %24, %2, %cst_20 {dimension_numbers = #tpu.dot_dimension_numbers<[1], [0], [0], [1], [0, 0, 1, 1], [], []>} : vector<8x128xbf16>, vector<128x256xbf16>, vector<8x256xf32> -> vector<8x256xf32>
    %28 = arith.addf %27, %8 : vector<8x256xf32>
    %cst_21 = arith.constant 5.000000e-01 : f32
    %29 = vector.broadcast %cst_21 : f32 to vector<8x256xf32>
    %30 = arith.mulf %29, %28 : vector<8x256xf32>
    %31 = math.tanh %30 : vector<8x256xf32>
    %cst_22 = arith.constant 1.000000e+00 : f32
    %32 = vector.broadcast %cst_22 : f32 to vector<8x256xf32>
    %33 = arith.addf %31, %32 : vector<8x256xf32>
    %cst_23 = arith.constant 5.000000e-01 : f32
    %34 = vector.broadcast %cst_23 : f32 to vector<8x256xf32>
    %35 = arith.mulf %34, %33 : vector<8x256xf32>
    %36 = arith.cmpf ogt, %35, %26 : vector<8x256xf32>
    %cst_24 = arith.constant 1.000000e+00 : f32
    %cst_25 = arith.constant 0.000000e+00 : f32
    %37 = vector.broadcast %cst_24 : f32 to vector<8x256xf32>
    %38 = vector.broadcast %cst_25 : f32 to vector<8x256xf32>
    %39 = arith.select %36, %37, %38 : vector<8x256xi1>, vector<8x256xf32>
    %40 = arith.truncf %39 : vector<8x256xf32> to vector<8x256xbf16>
    %c1 = arith.constant 1 : index
    %c0_26 = arith.constant 0 : index
    %c0_27 = arith.constant 0 : index
    %41 = vector.load %arg6[%c1, %c0_26, %c0_27] : memref<6x8x128xf32, #tpu.memory_space<vmem>>, vector<1x8x128xf32>
    %42 = vector.shape_cast %41 : vector<1x8x128xf32> to vector<8x128xf32>
    %cst_28 = arith.constant dense<0.000000e+00> : vector<8x128xf32>
    %43 = tpu.matmul %40, %1, %cst_28 {dimension_numbers = #tpu.dot_dimension_numbers<[1], [0], [0], [1], [0, 0, 1, 1], [], []>} : vector<8x256xbf16>, vector<256x128xbf16>, vector<8x128xf32> -> vector<8x128xf32>
    %44 = arith.addf %43, %5 : vector<8x128xf32>
    %cst_29 = arith.constant 5.000000e-01 : f32
    %45 = vector.broadcast %cst_29 : f32 to vector<8x128xf32>
    %46 = arith.mulf %45, %44 : vector<8x128xf32>
    %47 = math.tanh %46 : vector<8x128xf32>
    %cst_30 = arith.constant 1.000000e+00 : f32
    %48 = vector.broadcast %cst_30 : f32 to vector<8x128xf32>
    %49 = arith.addf %47, %48 : vector<8x128xf32>
    %cst_31 = arith.constant 5.000000e-01 : f32
    %50 = vector.broadcast %cst_31 : f32 to vector<8x128xf32>
    %51 = arith.mulf %50, %49 : vector<8x128xf32>
    %52 = arith.cmpf ogt, %51, %42 : vector<8x128xf32>
    %cst_32 = arith.constant 1.000000e+00 : f32
    %cst_33 = arith.constant 0.000000e+00 : f32
    %53 = vector.broadcast %cst_32 : f32 to vector<8x128xf32>
    %54 = vector.broadcast %cst_33 : f32 to vector<8x128xf32>
    %55 = arith.select %52, %53, %54 : vector<8x128xi1>, vector<8x128xf32>
    %56 = arith.truncf %55 : vector<8x128xf32> to vector<8x128xbf16>
    %c1_34 = arith.constant 1 : index
    %c0_35 = arith.constant 0 : index
    %c0_36 = arith.constant 0 : index
    %57 = vector.load %arg7[%c1_34, %c0_35, %c0_36] : memref<5x8x256xf32, #tpu.memory_space<vmem>>, vector<1x8x256xf32>
    %58 = vector.shape_cast %57 : vector<1x8x256xf32> to vector<8x256xf32>
    %cst_37 = arith.constant dense<0.000000e+00> : vector<8x256xf32>
    %59 = tpu.matmul %56, %2, %cst_37 {dimension_numbers = #tpu.dot_dimension_numbers<[1], [0], [0], [1], [0, 0, 1, 1], [], []>} : vector<8x128xbf16>, vector<128x256xbf16>, vector<8x256xf32> -> vector<8x256xf32>
    %60 = arith.addf %59, %8 : vector<8x256xf32>
    %cst_38 = arith.constant 5.000000e-01 : f32
    %61 = vector.broadcast %cst_38 : f32 to vector<8x256xf32>
    %62 = arith.mulf %61, %60 : vector<8x256xf32>
    %63 = math.tanh %62 : vector<8x256xf32>
    %cst_39 = arith.constant 1.000000e+00 : f32
    %64 = vector.broadcast %cst_39 : f32 to vector<8x256xf32>
    %65 = arith.addf %63, %64 : vector<8x256xf32>
    %cst_40 = arith.constant 5.000000e-01 : f32
    %66 = vector.broadcast %cst_40 : f32 to vector<8x256xf32>
    %67 = arith.mulf %66, %65 : vector<8x256xf32>
    %68 = arith.cmpf ogt, %67, %58 : vector<8x256xf32>
    %cst_41 = arith.constant 1.000000e+00 : f32
    %cst_42 = arith.constant 0.000000e+00 : f32
    %69 = vector.broadcast %cst_41 : f32 to vector<8x256xf32>
    %70 = vector.broadcast %cst_42 : f32 to vector<8x256xf32>
    %71 = arith.select %68, %69, %70 : vector<8x256xi1>, vector<8x256xf32>
    %72 = arith.truncf %71 : vector<8x256xf32> to vector<8x256xbf16>
    %c2 = arith.constant 2 : index
    %c0_43 = arith.constant 0 : index
    %c0_44 = arith.constant 0 : index
    %73 = vector.load %arg6[%c2, %c0_43, %c0_44] : memref<6x8x128xf32, #tpu.memory_space<vmem>>, vector<1x8x128xf32>
    %74 = vector.shape_cast %73 : vector<1x8x128xf32> to vector<8x128xf32>
    %cst_45 = arith.constant dense<0.000000e+00> : vector<8x128xf32>
    %75 = tpu.matmul %72, %1, %cst_45 {dimension_numbers = #tpu.dot_dimension_numbers<[1], [0], [0], [1], [0, 0, 1, 1], [], []>} : vector<8x256xbf16>, vector<256x128xbf16>, vector<8x128xf32> -> vector<8x128xf32>
    %76 = arith.addf %75, %5 : vector<8x128xf32>
    %cst_46 = arith.constant 5.000000e-01 : f32
    %77 = vector.broadcast %cst_46 : f32 to vector<8x128xf32>
    %78 = arith.mulf %77, %76 : vector<8x128xf32>
    %79 = math.tanh %78 : vector<8x128xf32>
    %cst_47 = arith.constant 1.000000e+00 : f32
    %80 = vector.broadcast %cst_47 : f32 to vector<8x128xf32>
    %81 = arith.addf %79, %80 : vector<8x128xf32>
    %cst_48 = arith.constant 5.000000e-01 : f32
    %82 = vector.broadcast %cst_48 : f32 to vector<8x128xf32>
    %83 = arith.mulf %82, %81 : vector<8x128xf32>
    %84 = arith.cmpf ogt, %83, %74 : vector<8x128xf32>
    %cst_49 = arith.constant 1.000000e+00 : f32
    %cst_50 = arith.constant 0.000000e+00 : f32
    %85 = vector.broadcast %cst_49 : f32 to vector<8x128xf32>
    %86 = vector.broadcast %cst_50 : f32 to vector<8x128xf32>
    %87 = arith.select %84, %85, %86 : vector<8x128xi1>, vector<8x128xf32>
    %88 = arith.truncf %87 : vector<8x128xf32> to vector<8x128xbf16>
    %c2_51 = arith.constant 2 : index
    %c0_52 = arith.constant 0 : index
    %c0_53 = arith.constant 0 : index
    %89 = vector.load %arg7[%c2_51, %c0_52, %c0_53] : memref<5x8x256xf32, #tpu.memory_space<vmem>>, vector<1x8x256xf32>
    %90 = vector.shape_cast %89 : vector<1x8x256xf32> to vector<8x256xf32>
    %cst_54 = arith.constant dense<0.000000e+00> : vector<8x256xf32>
    %91 = tpu.matmul %88, %2, %cst_54 {dimension_numbers = #tpu.dot_dimension_numbers<[1], [0], [0], [1], [0, 0, 1, 1], [], []>} : vector<8x128xbf16>, vector<128x256xbf16>, vector<8x256xf32> -> vector<8x256xf32>
    %92 = arith.addf %91, %8 : vector<8x256xf32>
    %cst_55 = arith.constant 5.000000e-01 : f32
    %93 = vector.broadcast %cst_55 : f32 to vector<8x256xf32>
    %94 = arith.mulf %93, %92 : vector<8x256xf32>
    %95 = math.tanh %94 : vector<8x256xf32>
    %cst_56 = arith.constant 1.000000e+00 : f32
    %96 = vector.broadcast %cst_56 : f32 to vector<8x256xf32>
    %97 = arith.addf %95, %96 : vector<8x256xf32>
    %cst_57 = arith.constant 5.000000e-01 : f32
    %98 = vector.broadcast %cst_57 : f32 to vector<8x256xf32>
    %99 = arith.mulf %98, %97 : vector<8x256xf32>
    %100 = arith.cmpf ogt, %99, %90 : vector<8x256xf32>
    %cst_58 = arith.constant 1.000000e+00 : f32
    %cst_59 = arith.constant 0.000000e+00 : f32
    %101 = vector.broadcast %cst_58 : f32 to vector<8x256xf32>
    %102 = vector.broadcast %cst_59 : f32 to vector<8x256xf32>
    %103 = arith.select %100, %101, %102 : vector<8x256xi1>, vector<8x256xf32>
    %104 = arith.truncf %103 : vector<8x256xf32> to vector<8x256xbf16>
    %c3 = arith.constant 3 : index
    %c0_60 = arith.constant 0 : index
    %c0_61 = arith.constant 0 : index
    %105 = vector.load %arg6[%c3, %c0_60, %c0_61] : memref<6x8x128xf32, #tpu.memory_space<vmem>>, vector<1x8x128xf32>
    %106 = vector.shape_cast %105 : vector<1x8x128xf32> to vector<8x128xf32>
    %cst_62 = arith.constant dense<0.000000e+00> : vector<8x128xf32>
    %107 = tpu.matmul %104, %1, %cst_62 {dimension_numbers = #tpu.dot_dimension_numbers<[1], [0], [0], [1], [0, 0, 1, 1], [], []>} : vector<8x256xbf16>, vector<256x128xbf16>, vector<8x128xf32> -> vector<8x128xf32>
    %108 = arith.addf %107, %5 : vector<8x128xf32>
    %cst_63 = arith.constant 5.000000e-01 : f32
    %109 = vector.broadcast %cst_63 : f32 to vector<8x128xf32>
    %110 = arith.mulf %109, %108 : vector<8x128xf32>
    %111 = math.tanh %110 : vector<8x128xf32>
    %cst_64 = arith.constant 1.000000e+00 : f32
    %112 = vector.broadcast %cst_64 : f32 to vector<8x128xf32>
    %113 = arith.addf %111, %112 : vector<8x128xf32>
    %cst_65 = arith.constant 5.000000e-01 : f32
    %114 = vector.broadcast %cst_65 : f32 to vector<8x128xf32>
    %115 = arith.mulf %114, %113 : vector<8x128xf32>
    %116 = arith.cmpf ogt, %115, %106 : vector<8x128xf32>
    %cst_66 = arith.constant 1.000000e+00 : f32
    %cst_67 = arith.constant 0.000000e+00 : f32
    %117 = vector.broadcast %cst_66 : f32 to vector<8x128xf32>
    %118 = vector.broadcast %cst_67 : f32 to vector<8x128xf32>
    %119 = arith.select %116, %117, %118 : vector<8x128xi1>, vector<8x128xf32>
    %120 = arith.truncf %119 : vector<8x128xf32> to vector<8x128xbf16>
    %c3_68 = arith.constant 3 : index
    %c0_69 = arith.constant 0 : index
    %c0_70 = arith.constant 0 : index
    %121 = vector.load %arg7[%c3_68, %c0_69, %c0_70] : memref<5x8x256xf32, #tpu.memory_space<vmem>>, vector<1x8x256xf32>
    %122 = vector.shape_cast %121 : vector<1x8x256xf32> to vector<8x256xf32>
    %cst_71 = arith.constant dense<0.000000e+00> : vector<8x256xf32>
    %123 = tpu.matmul %120, %2, %cst_71 {dimension_numbers = #tpu.dot_dimension_numbers<[1], [0], [0], [1], [0, 0, 1, 1], [], []>} : vector<8x128xbf16>, vector<128x256xbf16>, vector<8x256xf32> -> vector<8x256xf32>
    %124 = arith.addf %123, %8 : vector<8x256xf32>
    %cst_72 = arith.constant 5.000000e-01 : f32
    %125 = vector.broadcast %cst_72 : f32 to vector<8x256xf32>
    %126 = arith.mulf %125, %124 : vector<8x256xf32>
    %127 = math.tanh %126 : vector<8x256xf32>
    %cst_73 = arith.constant 1.000000e+00 : f32
    %128 = vector.broadcast %cst_73 : f32 to vector<8x256xf32>
    %129 = arith.addf %127, %128 : vector<8x256xf32>
    %cst_74 = arith.constant 5.000000e-01 : f32
    %130 = vector.broadcast %cst_74 : f32 to vector<8x256xf32>
    %131 = arith.mulf %130, %129 : vector<8x256xf32>
    %132 = arith.cmpf ogt, %131, %122 : vector<8x256xf32>
    %cst_75 = arith.constant 1.000000e+00 : f32
    %cst_76 = arith.constant 0.000000e+00 : f32
    %133 = vector.broadcast %cst_75 : f32 to vector<8x256xf32>
    %134 = vector.broadcast %cst_76 : f32 to vector<8x256xf32>
    %135 = arith.select %132, %133, %134 : vector<8x256xi1>, vector<8x256xf32>
    %136 = arith.truncf %135 : vector<8x256xf32> to vector<8x256xbf16>
    %c4 = arith.constant 4 : index
    %c0_77 = arith.constant 0 : index
    %c0_78 = arith.constant 0 : index
    %137 = vector.load %arg6[%c4, %c0_77, %c0_78] : memref<6x8x128xf32, #tpu.memory_space<vmem>>, vector<1x8x128xf32>
    %138 = vector.shape_cast %137 : vector<1x8x128xf32> to vector<8x128xf32>
    %cst_79 = arith.constant dense<0.000000e+00> : vector<8x128xf32>
    %139 = tpu.matmul %136, %1, %cst_79 {dimension_numbers = #tpu.dot_dimension_numbers<[1], [0], [0], [1], [0, 0, 1, 1], [], []>} : vector<8x256xbf16>, vector<256x128xbf16>, vector<8x128xf32> -> vector<8x128xf32>
    %140 = arith.addf %139, %5 : vector<8x128xf32>
    %cst_80 = arith.constant 5.000000e-01 : f32
    %141 = vector.broadcast %cst_80 : f32 to vector<8x128xf32>
    %142 = arith.mulf %141, %140 : vector<8x128xf32>
    %143 = math.tanh %142 : vector<8x128xf32>
    %cst_81 = arith.constant 1.000000e+00 : f32
    %144 = vector.broadcast %cst_81 : f32 to vector<8x128xf32>
    %145 = arith.addf %143, %144 : vector<8x128xf32>
    %cst_82 = arith.constant 5.000000e-01 : f32
    %146 = vector.broadcast %cst_82 : f32 to vector<8x128xf32>
    %147 = arith.mulf %146, %145 : vector<8x128xf32>
    %148 = arith.cmpf ogt, %147, %138 : vector<8x128xf32>
    %cst_83 = arith.constant 1.000000e+00 : f32
    %cst_84 = arith.constant 0.000000e+00 : f32
    %149 = vector.broadcast %cst_83 : f32 to vector<8x128xf32>
    %150 = vector.broadcast %cst_84 : f32 to vector<8x128xf32>
    %151 = arith.select %148, %149, %150 : vector<8x128xi1>, vector<8x128xf32>
    %152 = arith.truncf %151 : vector<8x128xf32> to vector<8x128xbf16>
    %c4_85 = arith.constant 4 : index
    %c0_86 = arith.constant 0 : index
    %c0_87 = arith.constant 0 : index
    %153 = vector.load %arg7[%c4_85, %c0_86, %c0_87] : memref<5x8x256xf32, #tpu.memory_space<vmem>>, vector<1x8x256xf32>
    %154 = vector.shape_cast %153 : vector<1x8x256xf32> to vector<8x256xf32>
    %cst_88 = arith.constant dense<0.000000e+00> : vector<8x256xf32>
    %155 = tpu.matmul %152, %2, %cst_88 {dimension_numbers = #tpu.dot_dimension_numbers<[1], [0], [0], [1], [0, 0, 1, 1], [], []>} : vector<8x128xbf16>, vector<128x256xbf16>, vector<8x256xf32> -> vector<8x256xf32>
    %156 = arith.addf %155, %8 : vector<8x256xf32>
    %cst_89 = arith.constant 5.000000e-01 : f32
    %157 = vector.broadcast %cst_89 : f32 to vector<8x256xf32>
    %158 = arith.mulf %157, %156 : vector<8x256xf32>
    %159 = math.tanh %158 : vector<8x256xf32>
    %cst_90 = arith.constant 1.000000e+00 : f32
    %160 = vector.broadcast %cst_90 : f32 to vector<8x256xf32>
    %161 = arith.addf %159, %160 : vector<8x256xf32>
    %cst_91 = arith.constant 5.000000e-01 : f32
    %162 = vector.broadcast %cst_91 : f32 to vector<8x256xf32>
    %163 = arith.mulf %162, %161 : vector<8x256xf32>
    %164 = arith.cmpf ogt, %163, %154 : vector<8x256xf32>
    %cst_92 = arith.constant 1.000000e+00 : f32
    %cst_93 = arith.constant 0.000000e+00 : f32
    %165 = vector.broadcast %cst_92 : f32 to vector<8x256xf32>
    %166 = vector.broadcast %cst_93 : f32 to vector<8x256xf32>
    %167 = arith.select %164, %165, %166 : vector<8x256xi1>, vector<8x256xf32>
    %168 = arith.truncf %167 : vector<8x256xf32> to vector<8x256xbf16>
    %169 = arith.extf %168 : vector<8x256xbf16> to vector<8x256xf32>
    %c0_94 = arith.constant 0 : index
    %c0_95 = arith.constant 0 : index
    %170 = vector.load %arg8[%c0_94, %c0_95] : memref<8x256xf32, #tpu.memory_space<vmem>>, vector<8x256xf32>
    tpu.vector_store %arg8[%c0_94, %c0_95], %169 {strides = array<i32>} : memref<8x256xf32, #tpu.memory_space<vmem>>, vector<8x256xf32>,
    return
  }
  func.func @transform_0(%arg0: i32) -> (i32, i32) {
    %c0_i32 = arith.constant 0 : i32
    %c0_i32_0 = arith.constant 0 : i32
    return %arg0, %c0_i32 : i32, i32
  }
  func.func @transform_1(%arg0: i32) -> (i32, i32) {
    %c0_i32 = arith.constant 0 : i32
    %c0_i32_0 = arith.constant 0 : i32
    %c0_i32_1 = arith.constant 0 : i32
    return %c0_i32, %c0_i32_0 : i32, i32
  }
  func.func @transform_2(%arg0: i32) -> (i32, i32) {
    %c0_i32 = arith.constant 0 : i32
    %c0_i32_0 = arith.constant 0 : i32
    %c0_i32_1 = arith.constant 0 : i32
    return %c0_i32, %c0_i32_0 : i32, i32
  }
  func.func @transform_3(%arg0: i32) -> (i32, i32) {
    %c0_i32 = arith.constant 0 : i32
    %c0_i32_0 = arith.constant 0 : i32
    %c0_i32_1 = arith.constant 0 : i32
    return %c0_i32, %c0_i32_0 : i32, i32
  }
  func.func @transform_4(%arg0: i32) -> (i32, i32) {
    %c0_i32 = arith.constant 0 : i32
    %c0_i32_0 = arith.constant 0 : i32
    %c0_i32_1 = arith.constant 0 : i32
    return %c0_i32, %c0_i32_0 : i32, i32
  }
  func.func @transform_5(%arg0: i32) -> (i32, i32, i32) {
    %c0_i32 = arith.constant 0 : i32
    %c0_i32_0 = arith.constant 0 : i32
    %c0_i32_1 = arith.constant 0 : i32
    return %c0_i32, %arg0, %c0_i32_0 : i32, i32, i32
  }
  func.func @transform_6(%arg0: i32) -> (i32, i32, i32) {
    %c0_i32 = arith.constant 0 : i32
    %c0_i32_0 = arith.constant 0 : i32
    %c0_i32_1 = arith.constant 0 : i32
    return %c0_i32, %arg0, %c0_i32_0 : i32, i32, i32
  }
  func.func @transform_7(%arg0: i32) -> (i32, i32) {
    %c0_i32 = arith.constant 0 : i32
    %c0_i32_0 = arith.constant 0 : i32
    return %arg0, %c0_i32 : i32, i32
  }
}

</mosaic_0001>

<llo_original>
// kernel: tpu_custom_call.1
$region0: #{tpu_custom_call.1}
  #allocation0 [shape = 'u32[]', space=smem, size = 0x4, offset = 0x4, fixed_abs, tag = 'smem constant byte address 0x4 - core index']
  #allocation1 [shape = 'u32[144,128]{1,0:T(1,128)}', space=vmem, size = 0x12000, scoped, tag = 'internal scratch']
  %s0 = inlined_call_operand.hbm [shape: bf16[8,256], index: 0, kind: input, shape index: {}]
  %s1 = inlined_call_operand.hbm [shape: bf16[256,128], index: 1, kind: input, shape index: {}]
  %s2 = inlined_call_operand.hbm [shape: bf16[128,256], index: 2, kind: input, shape index: {}]
  %s3 = inlined_call_operand.vmem [shape: f32[1,128], index: 3, kind: input, shape index: {}]
  %s4 = inlined_call_operand.vmem [shape: f32[1,256], index: 4, kind: input, shape index: {}]
  %s5 = inlined_call_operand.hbm [shape: f32[6,8,128], index: 5, kind: input, shape index: {}]
  %s6 = inlined_call_operand.hbm [shape: f32[5,8,256], index: 6, kind: input, shape index: {}]
  %s7 = inlined_call_operand.hbm [shape: f32[8,256], index: 7, kind: output, shape index: {}]
  %s8 = sld [smem:[#allocation0]]
  $region58: #{tpu_custom_call.1} parent=0
    _
  %s10 = ssub.s32 1, %s8
  %s11 = scalar_select 0, %s10, %s8
  $region1: #{tpu_custom_call.1} parent=0
    #allocation2 [shape = 'u8[4096]{0}', space=vmem, size = 0x1000, scoped, tag = 'input window, operand 0, single buffered']
    #allocation3 [shape = 's32[1]{0}', space=sflag, size = 0x4, scoped, tag = 'scoped memory for tpu_custom_call.1']
    #allocation4 [shape = 's32[1]{0}', space=sflag, size = 0x4, scoped, tag = 'scoped memory for tpu_custom_call.1']
    #allocation5 [shape = 'u8[65536]{0}', space=vmem, size = 0x10000, scoped, tag = 'input window, operand 1, single buffered']
    #allocation6 [shape = 's32[1]{0}', space=sflag, size = 0x4, scoped, tag = 'scoped memory for tpu_custom_call.1']
    #allocation7 [shape = 'u8[65536]{0}', space=vmem, size = 0x10000, scoped, tag = 'input window, operand 2, single buffered']
    #allocation8 [shape = 'u8[24576]{0}', space=vmem, size = 0x6000, scoped, tag = 'input window, operand 5, single buffered']
    #allocation9 [shape = 's32[1]{0}', space=sflag, size = 0x4, scoped, tag = 'scoped memory for tpu_custom_call.1']
    #allocation10 [shape = 'u8[40960]{0}', space=vmem, size = 0xa000, scoped, tag = 'input window, operand 6, single buffered']
    #allocation11 [shape = 'u8[8192]{0}', space=vmem, size = 0x2000, scoped, tag = 'output window, operand 0, single buffered']
    %12 = vsyncpa [#allocation3], 0
    %13 = vsyncpa [#allocation6], 0
    %14 = vsyncpa [#allocation9], 0
    %15 = vsyncpa [#allocation4], 0
    // Predicated region
    $region2: #{tpu_custom_call.1} parent=1 // pred_check
      _
    $region3: #{tpu_custom_call.1} parent=1 // pred_check_branch
      %17 = sbr.rel (0) target = $region5
    $region4: #{tpu_custom_call.1} parent=1 // pred_region
      %s19 = ssub.s32 128, 128
      %20 = vsyncadd [#allocation3], %s19
      %s22 = sshll.u32 [#allocation2], 4
      %s23 = int_to_ptr.vmem [resolvable:$true] %s22
      %25 = dma.hbm_to_vmem [thread:$0]  %s0, 128, %s23, [#allocation3]
    $region5: #{tpu_custom_call.1} parent=1 // pred_fallthru
      _
    // Predicated region
    $region6: #{tpu_custom_call.1} parent=1 // pred_check
      _
    $region7: #{tpu_custom_call.1} parent=1 // pred_check_branch
      %27 = sbr.rel (0) target = $region9
    $region8: #{tpu_custom_call.1} parent=1 // pred_region
      %s29 = ssub.s32 2048, 2048
      %30 = vsyncadd [#allocation6], %s29
      %s31 = sshll.u32 [#allocation5], 4
      %s32 = int_to_ptr.vmem [resolvable:$true] %s31
      %37 = dma.hbm_to_vmem [thread:$0]  %s1, 2048, %s32, [#allocation6], 64, 64, 4
    $region9: #{tpu_custom_call.1} parent=1 // pred_fallthru
      _
    // Predicated region
    $region10: #{tpu_custom_call.1} parent=1 // pred_check
      _
    $region11: #{tpu_custom_call.1} parent=1 // pred_check_branch
      %39 = sbr.rel (0) target = $region13
    $region12: #{tpu_custom_call.1} parent=1 // pred_region
      %s41 = ssub.s32 2048, 2048
      %42 = vsyncadd [#allocation6], %s41
      %s43 = sshll.u32 [#allocation7], 4
      %s44 = int_to_ptr.vmem [resolvable:$true] %s43
      %49 = dma.hbm_to_vmem [thread:$0]  %s2, 2048, %s44, [#allocation6], 128, 128, 8
    $region13: #{tpu_custom_call.1} parent=1 // pred_fallthru
      _
    // Predicated region
    $region14: #{tpu_custom_call.1} parent=1 // pred_check
      _
    $region15: #{tpu_custom_call.1} parent=1 // pred_check_branch
      %51 = sbr.rel (0) target = $region17
    $region16: #{tpu_custom_call.1} parent=1 // pred_region
      _
    $region17: #{tpu_custom_call.1} parent=1 // pred_fallthru
      _
    // Predicated region
    $region18: #{tpu_custom_call.1} parent=1 // pred_check
      _
    $region19: #{tpu_custom_call.1} parent=1 // pred_check_branch
      %53 = sbr.rel (0) target = $region21
    $region20: #{tpu_custom_call.1} parent=1 // pred_region
      _
    $region21: #{tpu_custom_call.1} parent=1 // pred_fallthru
      _
    // Predicated region
    $region22: #{tpu_custom_call.1} parent=1 // pred_check
      _
    $region23: #{tpu_custom_call.1} parent=1 // pred_check_branch
      %55 = sbr.rel (0) target = $region25
    $region24: #{tpu_custom_call.1} parent=1 // pred_region
      %s57 = ssub.s32 768, 768
      %58 = vsyncadd [#allocation9], %s57
      %s59 = sshll.u32 [#allocation8], 4
      %s60 = int_to_ptr.vmem [resolvable:$true] %s59
      %65 = dma.hbm_to_vmem [thread:$0]  %s5, 768, %s60, [#allocation9], 128, 128, 8
    $region25: #{tpu_custom_call.1} parent=1 // pred_fallthru
      _
    // Predicated region
    $region26: #{tpu_custom_call.1} parent=1 // pred_check
      _
    $region27: #{tpu_custom_call.1} parent=1 // pred_check_branch
      %67 = sbr.rel (0) target = $region29
    $region28: #{tpu_custom_call.1} parent=1 // pred_region
      %s69 = ssub.s32 1280, 1280
      %70 = vsyncadd [#allocation9], %s69
      %s71 = sshll.u32 [#allocation10], 4
      %s72 = int_to_ptr.vmem [resolvable:$true] %s71
      %77 = dma.hbm_to_vmem [thread:$0]  %s6, 1280, %s72, [#allocation9], 256, 256, 16
    $region29: #{tpu_custom_call.1} parent=1 // pred_fallthru
      _
    // Predicated region
    $region30: #{tpu_custom_call.1} parent=1 // pred_check
      _
    $region31: #{tpu_custom_call.1} parent=1 // pred_check_branch
      %79 = sbr.rel (0) target = $region33
    $region32: #{tpu_custom_call.1} parent=1 // pred_region
      %80 = dma.done [#allocation3], 128
    $region33: #{tpu_custom_call.1} parent=1 // pred_fallthru
      _
    // Predicated region
    $region34: #{tpu_custom_call.1} parent=1 // pred_check
      _
    $region35: #{tpu_custom_call.1} parent=1 // pred_check_branch
      %82 = sbr.rel (0) target = $region37
    $region36: #{tpu_custom_call.1} parent=1 // pred_region
      %83 = dma.done [#allocation6], 2048
    $region37: #{tpu_custom_call.1} parent=1 // pred_fallthru
      _
    // Predicated region
    $region38: #{tpu_custom_call.1} parent=1 // pred_check
      _
    $region39: #{tpu_custom_call.1} parent=1 // pred_check_branch
      %85 = sbr.rel (0) target = $region41
    $region40: #{tpu_custom_call.1} parent=1 // pred_region
      %86 = dma.done [#allocation6], 2048
    $region41: #{tpu_custom_call.1} parent=1 // pred_fallthru
      _
    // Predicated region
    $region42: #{tpu_custom_call.1} parent=1 // pred_check
      _
    $region43: #{tpu_custom_call.1} parent=1 // pred_check_branch
      %88 = sbr.rel (0) target = $region45
    $region44: #{tpu_custom_call.1} parent=1 // pred_region
      %89 = dma.done [#allocation9], 768
    $region45: #{tpu_custom_call.1} parent=1 // pred_fallthru
      _
    // Predicated region
    $region46: #{tpu_custom_call.1} parent=1 // pred_check
      _
    $region47: #{tpu_custom_call.1} parent=1 // pred_check_branch
      %91 = sbr.rel (0) target = $region49
    $region48: #{tpu_custom_call.1} parent=1 // pred_region
      %92 = dma.done [#allocation9], 1280
    $region49: #{tpu_custom_call.1} parent=1 // pred_fallthru
      _
    %v94 = vld [vmem:[#allocation2] sm:$0xff]
    %v95 = vld [vmem:[#allocation5] sm:$0xf]
    %v96 = vld [vmem:[#allocation5 + $0x4] sm:$0xf]
    %v97 = vld [vmem:[#allocation5 + $0x8] sm:$0xf]
    %v98 = vld [vmem:[#allocation5 + $0xc] sm:$0xf]
    %v99 = vld [vmem:[#allocation5 + $0x10] sm:$0xf]
    %v100 = vld [vmem:[#allocation5 + $0x14] sm:$0xf]
    %v101 = vld [vmem:[#allocation5 + $0x18] sm:$0xf]
    %v102 = vld [vmem:[#allocation5 + $0x1c] sm:$0xf]
    %v103 = vld [vmem:[#allocation5 + $0x20] sm:$0xf]
    %v104 = vld [vmem:[#allocation5 + $0x24] sm:$0xf]
    %v105 = vld [vmem:[#allocation5 + $0x28] sm:$0xf]
    %v106 = vld [vmem:[#allocation5 + $0x2c] sm:$0xf]
    %v107 = vld [vmem:[#allocation5 + $0x30] sm:$0xf]
    %v108 = vld [vmem:[#allocation5 + $0x34] sm:$0xf]
    %v109 = vld [vmem:[#allocation5 + $0x38] sm:$0xf]
    %v110 = vld [vmem:[#allocation5 + $0x3c] sm:$0xf]
    %v111 = vld [vmem:[#allocation5 + $0x40] sm:$0xf]
    %v112 = vld [vmem:[#allocation5 + $0x44] sm:$0xf]
    %v113 = vld [vmem:[#allocation5 + $0x48] sm:$0xf]
    %v114 = vld [vmem:[#allocation5 + $0x4c] sm:$0xf]
    %v115 = vld [vmem:[#allocation5 + $0x50] sm:$0xf]
    %v116 = vld [vmem:[#allocation5 + $0x54] sm:$0xf]
    %v117 = vld [vmem:[#allocation5 + $0x58] sm:$0xf]
    %v118 = vld [vmem:[#allocation5 + $0x5c] sm:$0xf]
    %v119 = vld [vmem:[#allocation5 + $0x60] sm:$0xf]
    %v120 = vld [vmem:[#allocation5 + $0x64] sm:$0xf]
    %v121 = vld [vmem:[#allocation5 + $0x68] sm:$0xf]
    %v122 = vld [vmem:[#allocation5 + $0x6c] sm:$0xf]
    %v123 = vld [vmem:[#allocation5 + $0x70] sm:$0xf]
    %v124 = vld [vmem:[#allocation5 + $0x74] sm:$0xf]
    %v125 = vld [vmem:[#allocation5 + $0x78] sm:$0xf]
    %v126 = vld [vmem:[#allocation5 + $0x7c] sm:$0xf]
    %v127 = vld [vmem:[#allocation7] sm:$0xff]
    %v128 = vld [vmem:[#allocation7 + $0x8] sm:$0xff]
    %v129 = vld [vmem:[#allocation7 + $0x10] sm:$0xff]
    %v130 = vld [vmem:[#allocation7 + $0x18] sm:$0xff]
    %v131 = vld [vmem:[#allocation7 + $0x20] sm:$0xff]
    %v132 = vld [vmem:[#allocation7 + $0x28] sm:$0xff]
    %v133 = vld [vmem:[#allocation7 + $0x30] sm:$0xff]
    %v134 = vld [vmem:[#allocation7 + $0x38] sm:$0xff]
    %v135 = vld [vmem:[#allocation7 + $0x40] sm:$0xff]
    %v136 = vld [vmem:[#allocation7 + $0x48] sm:$0xff]
    %v137 = vld [vmem:[#allocation7 + $0x50] sm:$0xff]
    %v138 = vld [vmem:[#allocation7 + $0x58] sm:$0xff]
    %v139 = vld [vmem:[#allocation7 + $0x60] sm:$0xff]
    %v140 = vld [vmem:[#allocation7 + $0x68] sm:$0xff]
    %v141 = vld [vmem:[#allocation7 + $0x70] sm:$0xff]
    %v142 = vld [vmem:[#allocation7 + $0x78] sm:$0xff]
    %v143 = vld [vmem:[%s3] sm:$0x1]
    %v145 = vlaneseq
    %v146 = vshrl.u32 %v145, 7
    %v147 = vsub.s32 0, %v146
    %v148 = vrot.slane %v143, %v147
    %v150 = vld [vmem:[%s4] sm:$0x3]
    %v152 = vlaneseq
    %v153 = vshrl.u32 %v152, 7
    %v154 = vsub.s32 0, %v153
    %v155 = vrot.slane %v150, %v154
    %v156 = vlaneseq
    %v157 = vshrl.u32 %v156, 7
    %v158 = vsub.s32 1, %v157
    %v159 = vrot.slane %v150, %v158
    %v162 = vld [vmem:[#allocation8] sm:$0xff]
    %v164 = vunpack.c.l.b16 %v94
    %v165 = vunpack.c.h.b16 %v94
    %v166 = vpack.c.b16 %v164, %v164
    %v167 = vpack.c.b16 %v165, %v165
    %v202 = vunpack.c.l.b16 %v95
    %v203 = vunpack.c.l.b16 %v96
    %v204 = vunpack.c.l.b16 %v97
    %v205 = vunpack.c.l.b16 %v98
    %v206 = vunpack.c.l.b16 %v99
    %v207 = vunpack.c.l.b16 %v100
    %v208 = vunpack.c.l.b16 %v101
    %v209 = vunpack.c.l.b16 %v102
    %v210 = vunpack.c.l.b16 %v103
    %v211 = vunpack.c.l.b16 %v104
    %v212 = vunpack.c.l.b16 %v105
    %v213 = vunpack.c.l.b16 %v106
    %v214 = vunpack.c.l.b16 %v107
    %v215 = vunpack.c.l.b16 %v108
    %v216 = vunpack.c.l.b16 %v109
    %v217 = vunpack.c.l.b16 %v110
    %v218 = vunpack.c.l.b16 %v111
    %v219 = vunpack.c.l.b16 %v112
    %v220 = vunpack.c.l.b16 %v113
    %v221 = vunpack.c.l.b16 %v114
    %v222 = vunpack.c.l.b16 %v115
    %v223 = vunpack.c.l.b16 %v116
    %v224 = vunpack.c.l.b16 %v117
    %v225 = vunpack.c.l.b16 %v118
    %v226 = vunpack.c.l.b16 %v119
    %v227 = vunpack.c.l.b16 %v120
    %v228 = vunpack.c.l.b16 %v121
    %v229 = vunpack.c.l.b16 %v122
    %v230 = vunpack.c.l.b16 %v123
    %v231 = vunpack.c.l.b16 %v124
    %v232 = vunpack.c.l.b16 %v125
    %v233 = vunpack.c.l.b16 %v126
    %v234 = vpack.c.b16 %v203, %v202
    %v235 = vpack.c.b16 %v205, %v204
    %v236 = vpack.c.b16 %v207, %v206
    %v237 = vpack.c.b16 %v209, %v208
    %v238 = vpack.c.b16 %v211, %v210
    %v239 = vpack.c.b16 %v213, %v212
    %v240 = vpack.c.b16 %v215, %v214
    %v241 = vpack.c.b16 %v217, %v216
    %v242 = vpack.c.b16 %v219, %v218
    %v243 = vpack.c.b16 %v221, %v220
    %v244 = vpack.c.b16 %v223, %v222
    %v245 = vpack.c.b16 %v225, %v224
    %v246 = vpack.c.b16 %v227, %v226
    %v247 = vpack.c.b16 %v229, %v228
    %v248 = vpack.c.b16 %v231, %v230
    %v249 = vpack.c.b16 %v233, %v232
    %266 = vmatprep.subr.bf16.mxu0 0
    %267 = vmatpush1.bf16.msra.mxu0 %v234
    %268 = vmatprep.subr.bf16.mxu0 0
    %269 = vmatpush1.bf16.msra.mxu0 %v235
    %270 = vmatprep.subr.bf16.mxu0 0
    %271 = vmatpush1.bf16.msra.mxu0 %v236
    %272 = vmatprep.subr.bf16.mxu0 0
    %273 = vmatpush1.bf16.msra.mxu0 %v237
    %274 = vmatprep.subr.bf16.mxu0 0
    %275 = vmatpush1.bf16.msra.mxu0 %v238
    %276 = vmatprep.subr.bf16.mxu0 0
    %277 = vmatpush1.bf16.msra.mxu0 %v239
    %278 = vmatprep.subr.bf16.mxu0 0
    %279 = vmatpush1.bf16.msra.mxu0 %v240
    %280 = vmatprep.subr.bf16.mxu0 0
    %281 = vmatpush1.bf16.msra.mxu0 %v241
    %282 = vmatprep.subr.bf16.mxu0 0
    %283 = vmatpush1.bf16.msra.mxu0 %v242
    %284 = vmatprep.subr.bf16.mxu0 0
    %285 = vmatpush1.bf16.msra.mxu0 %v243
    %286 = vmatprep.subr.bf16.mxu0 0
    %287 = vmatpush1.bf16.msra.mxu0 %v244
    %288 = vmatprep.subr.bf16.mxu0 0
    %289 = vmatpush1.bf16.msra.mxu0 %v245
    %290 = vmatprep.subr.bf16.mxu0 0
    %291 = vmatpush1.bf16.msra.mxu0 %v246
    %292 = vmatprep.subr.bf16.mxu0 0
    %293 = vmatpush1.bf16.msra.mxu0 %v247
    %294 = vmatprep.subr.bf16.mxu0 0
    %295 = vmatpush1.bf16.msra.mxu0 %v248
    %296 = vmatprep.subr.bf16.mxu0 0
    %297 = vmatpush1.bf16.msra.mxu0 %v249
    %298 = vmatprep.mubr.bf16.mxu0 %v167
    %299 = vmatmul.mubr.bf16.gmra.mrb[0].mxu0 %v166
    %v300 = vpop.f32.mrb[0].mxu0
    %v301 = vadd.f32 %v148, %v300
    %v302 = vpop.f32.mrb[0].mxu0
    %v303 = vpop.f32.mrb[0].mxu0
    %v304 = vpop.f32.mrb[0].mxu0
    %305 = vdwg.mxu0
    %v306 = vmul.f32 %v301, 0.5
    %v307 = vtanh.pop %v306
    %v308 = vadd.f32 %v307, 1.0
    %v309 = vmul.f32 %v308, 0.5
    %vm310 = vcmp.gt.f32.partialorder %v309, %v162
    %v311 = vsel %vm310, 1.0, 0.0
    %v312 = vpack.c.bf16 %v311, %v311
    %v313 = vld [vmem:[#allocation10] sm:$0xff]
    %v314 = vld [vmem:[#allocation10 + $0x8] sm:$0xff]
    %v331 = vunpack.c.l.b16 %v127
    %v332 = vunpack.c.h.b16 %v127
    %v333 = vunpack.c.l.b16 %v128
    %v334 = vunpack.c.h.b16 %v128
    %v335 = vunpack.c.l.b16 %v129
    %v336 = vunpack.c.h.b16 %v129
    %v337 = vunpack.c.l.b16 %v130
    %v338 = vunpack.c.h.b16 %v130
    %v339 = vunpack.c.l.b16 %v131
    %v340 = vunpack.c.h.b16 %v131
    %v341 = vunpack.c.l.b16 %v132
    %v342 = vunpack.c.h.b16 %v132
    %v343 = vunpack.c.l.b16 %v133
    %v344 = vunpack.c.h.b16 %v133
    %v345 = vunpack.c.l.b16 %v134
    %v346 = vunpack.c.h.b16 %v134
    %v347 = vunpack.c.l.b16 %v135
    %v348 = vunpack.c.h.b16 %v135
    %v349 = vunpack.c.l.b16 %v136
    %v350 = vunpack.c.h.b16 %v136
    %v351 = vunpack.c.l.b16 %v137
    %v352 = vunpack.c.h.b16 %v137
    %v353 = vunpack.c.l.b16 %v138
    %v354 = vunpack.c.h.b16 %v138
    %v355 = vunpack.c.l.b16 %v139
    %v356 = vunpack.c.h.b16 %v139
    %v357 = vunpack.c.l.b16 %v140
    %v358 = vunpack.c.h.b16 %v140
    %v359 = vunpack.c.l.b16 %v141
    %v360 = vunpack.c.h.b16 %v141
    %v361 = vunpack.c.l.b16 %v142
    %v362 = vunpack.c.h.b16 %v142
    %v363 = vpack.c.b16 %v333, %v331
    %v364 = vpack.c.b16 %v334, %v332
    %v365 = vpack.c.b16 %v337, %v335
    %v366 = vpack.c.b16 %v338, %v336
    %v367 = vpack.c.b16 %v341, %v339
    %v368 = vpack.c.b16 %v342, %v340
    %v369 = vpack.c.b16 %v345, %v343
    %v370 = vpack.c.b16 %v346, %v344
    %v371 = vpack.c.b16 %v349, %v347
    %v372 = vpack.c.b16 %v350, %v348
    %v373 = vpack.c.b16 %v353, %v351
    %v374 = vpack.c.b16 %v354, %v352
    %v375 = vpack.c.b16 %v357, %v355
    %v376 = vpack.c.b16 %v358, %v356
    %v377 = vpack.c.b16 %v361, %v359
    %v378 = vpack.c.b16 %v362, %v360
    %395 = vmatprep.subr.bf16.mxu0 %v364
    %396 = vmatpush1.bf16.msra.mxu0 %v363
    %397 = vmatprep.subr.bf16.mxu0 %v366
    %398 = vmatpush1.bf16.msra.mxu0 %v365
    %399 = vmatprep.subr.bf16.mxu0 %v368
    %400 = vmatpush1.bf16.msra.mxu0 %v367
    %401 = vmatprep.subr.bf16.mxu0 %v370
    %402 = vmatpush1.bf16.msra.mxu0 %v369
    %403 = vmatprep.subr.bf16.mxu0 %v372
    %404 = vmatpush1.bf16.msra.mxu0 %v371
    %405 = vmatprep.subr.bf16.mxu0 %v374
    %406 = vmatpush1.bf16.msra.mxu0 %v373
    %407 = vmatprep.subr.bf16.mxu0 %v376
    %408 = vmatpush1.bf16.msra.mxu0 %v375
    %409 = vmatprep.subr.bf16.mxu0 %v378
    %410 = vmatpush1.bf16.msra.mxu0 %v377
    %411 = vmatprep.subr.bf16.mxu0 0
    %412 = vmatpush1.bf16.msra.mxu0 0
    %413 = vmatprep.subr.bf16.mxu0 0
    %414 = vmatpush1.bf16.msra.mxu0 0
    %415 = vmatprep.subr.bf16.mxu0 0
    %416 = vmatpush1.bf16.msra.mxu0 0
    %417 = vmatprep.subr.bf16.mxu0 0
    %418 = vmatpush1.bf16.msra.mxu0 0
    %419 = vmatprep.subr.bf16.mxu0 0
    %420 = vmatpush1.bf16.msra.mxu0 0
    %421 = vmatprep.subr.bf16.mxu0 0
    %422 = vmatpush1.bf16.msra.mxu0 0
    %423 = vmatprep.subr.bf16.mxu0 0
    %424 = vmatpush1.bf16.msra.mxu0 0
    %425 = vmatprep.subr.bf16.mxu0 0
    %426 = vmatpush1.bf16.msra.mxu0 0
    %427 = vmatprep.mubr.bf16.mxu0 0
    %428 = vmatmul.mubr.bf16.gmra.mrb[0].mxu0 %v312
    %v429 = vpop.f32.mrb[0].mxu0
    %v430 = vadd.f32 %v155, %v429
    %v431 = vpop.f32.mrb[0].mxu0
    %v432 = vadd.f32 %v159, %v431
    %v433 = vpop.f32.mrb[0].mxu0
    %v434 = vpop.f32.mrb[0].mxu0
    %435 = vdwg.mxu0
    %v436 = vmul.f32 %v430, 0.5
    %v437 = vmul.f32 %v432, 0.5
    %v438 = vtanh.pop %v436
    %v439 = vtanh.pop %v437
    %v440 = vadd.f32 %v438, 1.0
    %v441 = vadd.f32 %v439, 1.0
    %v442 = vmul.f32 %v440, 0.5
    %v443 = vmul.f32 %v441, 0.5
    %vm444 = vcmp.gt.f32.partialorder %v442, %v313
    %vm445 = vcmp.gt.f32.partialorder %v443, %v314
    %v446 = vsel %vm444, 1.0, 0.0
    %v447 = vsel %vm445, 1.0, 0.0
    %v448 = vpack.c.bf16 %v446, %v446
    %v449 = vpack.c.bf16 %v447, %v447
    %s450 = scalar_lea.vmem [#allocation8], 8
    %v451 = vld [vmem:[%s450] sm:$0xff]
    %452 = vmatprep.subr.bf16.mxu0 0
    %453 = vmatpush1.bf16.msra.mxu0 %v234
    %454 = vmatprep.subr.bf16.mxu0 0
    %455 = vmatpush1.bf16.msra.mxu0 %v235
    %456 = vmatprep.subr.bf16.mxu0 0
    %457 = vmatpush1.bf16.msra.mxu0 %v236
    %458 = vmatprep.subr.bf16.mxu0 0
    %459 = vmatpush1.bf16.msra.mxu0 %v237
    %460 = vmatprep.subr.bf16.mxu0 0
    %461 = vmatpush1.bf16.msra.mxu0 %v238
    %462 = vmatprep.subr.bf16.mxu0 0
    %463 = vmatpush1.bf16.msra.mxu0 %v239
    %464 = vmatprep.subr.bf16.mxu0 0
    %465 = vmatpush1.bf16.msra.mxu0 %v240
    %466 = vmatprep.subr.bf16.mxu0 0
    %467 = vmatpush1.bf16.msra.mxu0 %v241
    %468 = vmatprep.subr.bf16.mxu0 0
    %469 = vmatpush1.bf16.msra.mxu0 %v242
    %470 = vmatprep.subr.bf16.mxu0 0
    %471 = vmatpush1.bf16.msra.mxu0 %v243
    %472 = vmatprep.subr.bf16.mxu0 0
    %473 = vmatpush1.bf16.msra.mxu0 %v244
    %474 = vmatprep.subr.bf16.mxu0 0
    %475 = vmatpush1.bf16.msra.mxu0 %v245
    %476 = vmatprep.subr.bf16.mxu0 0
    %477 = vmatpush1.bf16.msra.mxu0 %v246
    %478 = vmatprep.subr.bf16.mxu0 0
    %479 = vmatpush1.bf16.msra.mxu0 %v247
    %480 = vmatprep.subr.bf16.mxu0 0
    %481 = vmatpush1.bf16.msra.mxu0 %v248
    %482 = vmatprep.subr.bf16.mxu0 0
    %483 = vmatpush1.bf16.msra.mxu0 %v249
    %484 = vmatprep.mubr.bf16.mxu0 %v449
    %485 = vmatmul.mubr.bf16.gmra.mrb[0].mxu0 %v448
    %v486 = vpop.f32.mrb[0].mxu0
    %v487 = vadd.f32 %v148, %v486
    %v488 = vpop.f32.mrb[0].mxu0
    %v489 = vpop.f32.mrb[0].mxu0
    %v490 = vpop.f32.mrb[0].mxu0
    %491 = vdwg.mxu0
    %v492 = vmul.f32 %v487, 0.5
    %v493 = vtanh.pop %v492
    %v494 = vadd.f32 %v493, 1.0
    %v495 = vmul.f32 %v494, 0.5
    %vm496 = vcmp.gt.f32.partialorder %v495, %v451
    %v497 = vsel %vm496, 1.0, 0.0
    %v498 = vpack.c.bf16 %v497, %v497
    %s499 = scalar_lea.vmem [#allocation10], 16
    %v500 = vld [vmem:[%s499] sm:$0xff]
    %v501 = vld [vmem:[%s499 + $0x8] sm:$0xff]
    %502 = vmatprep.subr.bf16.mxu0 %v364
    %503 = vmatpush1.bf16.msra.mxu0 %v363
    %504 = vmatprep.subr.bf16.mxu0 %v366
    %505 = vmatpush1.bf16.msra.mxu0 %v365
    %506 = vmatprep.subr.bf16.mxu0 %v368
    %507 = vmatpush1.bf16.msra.mxu0 %v367
    %508 = vmatprep.subr.bf16.mxu0 %v370
    %509 = vmatpush1.bf16.msra.mxu0 %v369
    %510 = vmatprep.subr.bf16.mxu0 %v372
    %511 = vmatpush1.bf16.msra.mxu0 %v371
    %512 = vmatprep.subr.bf16.mxu0 %v374
    %513 = vmatpush1.bf16.msra.mxu0 %v373
    %514 = vmatprep.subr.bf16.mxu0 %v376
    %515 = vmatpush1.bf16.msra.mxu0 %v375
    %516 = vmatprep.subr.bf16.mxu0 %v378
    %517 = vmatpush1.bf16.msra.mxu0 %v377
    %518 = vmatprep.subr.bf16.mxu0 0
    %519 = vmatpush1.bf16.msra.mxu0 0
    %520 = vmatprep.subr.bf16.mxu0 0
    %521 = vmatpush1.bf16.msra.mxu0 0
    %522 = vmatprep.subr.bf16.mxu0 0
    %523 = vmatpush1.bf16.msra.mxu0 0
    %524 = vmatprep.subr.bf16.mxu0 0
    %525 = vmatpush1.bf16.msra.mxu0 0
    %526 = vmatprep.subr.bf16.mxu0 0
    %527 = vmatpush1.bf16.msra.mxu0 0
    %528 = vmatprep.subr.bf16.mxu0 0
    %529 = vmatpush1.bf16.msra.mxu0 0
    %530 = vmatprep.subr.bf16.mxu0 0
    %531 = vmatpush1.bf16.msra.mxu0 0
    %532 = vmatprep.subr.bf16.mxu0 0
    %533 = vmatpush1.bf16.msra.mxu0 0
    %534 = vmatprep.mubr.bf16.mxu0 0
    %535 = vmatmul.mubr.bf16.gmra.mrb[0].mxu0 %v498
    %v536 = vpop.f32.mrb[0].mxu0
    %v537 = vadd.f32 %v155, %v536
    %v538 = vpop.f32.mrb[0].mxu0
    %v539 = vadd.f32 %v159, %v538
    %v540 = vpop.f32.mrb[0].mxu0
    %v541 = vpop.f32.mrb[0].mxu0
    %542 = vdwg.mxu0
    %v543 = vmul.f32 %v537, 0.5
    %v544 = vmul.f32 %v539, 0.5
    %v545 = vtanh.pop %v543
    %v546 = vtanh.pop %v544
    %v547 = vadd.f32 %v545, 1.0
    %v548 = vadd.f32 %v546, 1.0
    %v549 = vmul.f32 %v547, 0.5
    %v550 = vmul.f32 %v548, 0.5
    %vm551 = vcmp.gt.f32.partialorder %v549, %v500
    %vm552 = vcmp.gt.f32.partialorder %v550, %v501
    %v553 = vsel %vm551, 1.0, 0.0
    %v554 = vsel %vm552, 1.0, 0.0
    %v555 = vpack.c.bf16 %v553, %v553
    %v556 = vpack.c.bf16 %v554, %v554
    %s557 = scalar_lea.vmem [#allocation8], 16
    %v558 = vld [vmem:[%s557] sm:$0xff]
    %559 = vmatprep.subr.bf16.mxu0 0
    %560 = vmatpush1.bf16.msra.mxu0 %v234
    %561 = vmatprep.subr.bf16.mxu0 0
    %562 = vmatpush1.bf16.msra.mxu0 %v235
    %563 = vmatprep.subr.bf16.mxu0 0
    %564 = vmatpush1.bf16.msra.mxu0 %v236
    %565 = vmatprep.subr.bf16.mxu0 0
    %566 = vmatpush1.bf16.msra.mxu0 %v237
    %567 = vmatprep.subr.bf16.mxu0 0
    %568 = vmatpush1.bf16.msra.mxu0 %v238
    %569 = vmatprep.subr.bf16.mxu0 0
    %570 = vmatpush1.bf16.msra.mxu0 %v239
    %571 = vmatprep.subr.bf16.mxu0 0
    %572 = vmatpush1.bf16.msra.mxu0 %v240
    %573 = vmatprep.subr.bf16.mxu0 0
    %574 = vmatpush1.bf16.msra.mxu0 %v241
    %575 = vmatprep.subr.bf16.mxu0 0
    %576 = vmatpush1.bf16.msra.mxu0 %v242
    %577 = vmatprep.subr.bf16.mxu0 0
    %578 = vmatpush1.bf16.msra.mxu0 %v243
    %579 = vmatprep.subr.bf16.mxu0 0
    %580 = vmatpush1.bf16.msra.mxu0 %v244
    %581 = vmatprep.subr.bf16.mxu0 0
    %582 = vmatpush1.bf16.msra.mxu0 %v245
    %583 = vmatprep.subr.bf16.mxu0 0
    %584 = vmatpush1.bf16.msra.mxu0 %v246
    %585 = vmatprep.subr.bf16.mxu0 0
    %586 = vmatpush1.bf16.msra.mxu0 %v247
    %587 = vmatprep.subr.bf16.mxu0 0
    %588 = vmatpush1.bf16.msra.mxu0 %v248
    %589 = vmatprep.subr.bf16.mxu0 0
    %590 = vmatpush1.bf16.msra.mxu0 %v249
    %591 = vmatprep.mubr.bf16.mxu0 %v556
    %592 = vmatmul.mubr.bf16.gmra.mrb[0].mxu0 %v555
    %v593 = vpop.f32.mrb[0].mxu0
    %v594 = vadd.f32 %v148, %v593
    %v595 = vpop.f32.mrb[0].mxu0
    %v596 = vpop.f32.mrb[0].mxu0
    %v597 = vpop.f32.mrb[0].mxu0
    %598 = vdwg.mxu0
    %v599 = vmul.f32 %v594, 0.5
    %v600 = vtanh.pop %v599
    %v601 = vadd.f32 %v600, 1.0
    %v602 = vmul.f32 %v601, 0.5
    %vm603 = vcmp.gt.f32.partialorder %v602, %v558
    %v604 = vsel %vm603, 1.0, 0.0
    %v605 = vpack.c.bf16 %v604, %v604
    %s606 = scalar_lea.vmem [#allocation10], 32
    %v607 = vld [vmem:[%s606] sm:$0xff]
    %v608 = vld [vmem:[%s606 + $0x8] sm:$0xff]
    %609 = vmatprep.subr.bf16.mxu0 %v364
    %610 = vmatpush1.bf16.msra.mxu0 %v363
    %611 = vmatprep.subr.bf16.mxu0 %v366
    %612 = vmatpush1.bf16.msra.mxu0 %v365
    %613 = vmatprep.subr.bf16.mxu0 %v368
    %614 = vmatpush1.bf16.msra.mxu0 %v367
    %615 = vmatprep.subr.bf16.mxu0 %v370
    %616 = vmatpush1.bf16.msra.mxu0 %v369
    %617 = vmatprep.subr.bf16.mxu0 %v372
    %618 = vmatpush1.bf16.msra.mxu0 %v371
    %619 = vmatprep.subr.bf16.mxu0 %v374
    %620 = vmatpush1.bf16.msra.mxu0 %v373
    %621 = vmatprep.subr.bf16.mxu0 %v376
    %622 = vmatpush1.bf16.msra.mxu0 %v375
    %623 = vmatprep.subr.bf16.mxu0 %v378
    %624 = vmatpush1.bf16.msra.mxu0 %v377
    %625 = vmatprep.subr.bf16.mxu0 0
    %626 = vmatpush1.bf16.msra.mxu0 0
    %627 = vmatprep.subr.bf16.mxu0 0
    %628 = vmatpush1.bf16.msra.mxu0 0
    %629 = vmatprep.subr.bf16.mxu0 0
    %630 = vmatpush1.bf16.msra.mxu0 0
    %631 = vmatprep.subr.bf16.mxu0 0
    %632 = vmatpush1.bf16.msra.mxu0 0
    %633 = vmatprep.subr.bf16.mxu0 0
    %634 = vmatpush1.bf16.msra.mxu0 0
    %635 = vmatprep.subr.bf16.mxu0 0
    %636 = vmatpush1.bf16.msra.mxu0 0
    %637 = vmatprep.subr.bf16.mxu0 0
    %638 = vmatpush1.bf16.msra.mxu0 0
    %639 = vmatprep.subr.bf16.mxu0 0
    %640 = vmatpush1.bf16.msra.mxu0 0
    %641 = vmatprep.mubr.bf16.mxu0 0
    %642 = vmatmul.mubr.bf16.gmra.mrb[0].mxu0 %v605
    %v643 = vpop.f32.mrb[0].mxu0
    %v644 = vadd.f32 %v155, %v643
    %v645 = vpop.f32.mrb[0].mxu0
    %v646 = vadd.f32 %v159, %v645
    %v647 = vpop.f32.mrb[0].mxu0
    %v648 = vpop.f32.mrb[0].mxu0
    %649 = vdwg.mxu0
    %v650 = vmul.f32 %v644, 0.5
    %v651 = vmul.f32 %v646, 0.5
    %v652 = vtanh.pop %v650
    %v653 = vtanh.pop %v651
    %v654 = vadd.f32 %v652, 1.0
    %v655 = vadd.f32 %v653, 1.0
    %v656 = vmul.f32 %v654, 0.5
    %v657 = vmul.f32 %v655, 0.5
    %vm658 = vcmp.gt.f32.partialorder %v656, %v607
    %vm659 = vcmp.gt.f32.partialorder %v657, %v608
    %v660 = vsel %vm658, 1.0, 0.0
    %v661 = vsel %vm659, 1.0, 0.0
    %v662 = vpack.c.bf16 %v660, %v660
    %v663 = vpack.c.bf16 %v661, %v661
    %s664 = scalar_lea.vmem [#allocation8], 24
    %v665 = vld [vmem:[%s664] sm:$0xff]
    %666 = vmatprep.subr.bf16.mxu0 0
    %667 = vmatpush1.bf16.msra.mxu0 %v234
    %668 = vmatprep.subr.bf16.mxu0 0
    %669 = vmatpush1.bf16.msra.mxu0 %v235
    %670 = vmatprep.subr.bf16.mxu0 0
    %671 = vmatpush1.bf16.msra.mxu0 %v236
    %672 = vmatprep.subr.bf16.mxu0 0
    %673 = vmatpush1.bf16.msra.mxu0 %v237
    %674 = vmatprep.subr.bf16.mxu0 0
    %675 = vmatpush1.bf16.msra.mxu0 %v238
    %676 = vmatprep.subr.bf16.mxu0 0
    %677 = vmatpush1.bf16.msra.mxu0 %v239
    %678 = vmatprep.subr.bf16.mxu0 0
    %679 = vmatpush1.bf16.msra.mxu0 %v240
    %680 = vmatprep.subr.bf16.mxu0 0
    %681 = vmatpush1.bf16.msra.mxu0 %v241
    %682 = vmatprep.subr.bf16.mxu0 0
    %683 = vmatpush1.bf16.msra.mxu0 %v242
    %684 = vmatprep.subr.bf16.mxu0 0
    %685 = vmatpush1.bf16.msra.mxu0 %v243
    %686 = vmatprep.subr.bf16.mxu0 0
    %687 = vmatpush1.bf16.msra.mxu0 %v244
    %688 = vmatprep.subr.bf16.mxu0 0
    %689 = vmatpush1.bf16.msra.mxu0 %v245
    %690 = vmatprep.subr.bf16.mxu0 0
    %691 = vmatpush1.bf16.msra.mxu0 %v246
    %692 = vmatprep.subr.bf16.mxu0 0
    %693 = vmatpush1.bf16.msra.mxu0 %v247
    %694 = vmatprep.subr.bf16.mxu0 0
    %695 = vmatpush1.bf16.msra.mxu0 %v248
    %696 = vmatprep.subr.bf16.mxu0 0
    %697 = vmatpush1.bf16.msra.mxu0 %v249
    %698 = vmatprep.mubr.bf16.mxu0 %v663
    %699 = vmatmul.mubr.bf16.gmra.mrb[0].mxu0 %v662
    %v700 = vpop.f32.mrb[0].mxu0
    %v701 = vadd.f32 %v148, %v700
    %v702 = vpop.f32.mrb[0].mxu0
    %v703 = vpop.f32.mrb[0].mxu0
    %v704 = vpop.f32.mrb[0].mxu0
    %705 = vdwg.mxu0
    %v706 = vmul.f32 %v701, 0.5
    %v707 = vtanh.pop %v706
    %v708 = vadd.f32 %v707, 1.0
    %v709 = vmul.f32 %v708, 0.5
    %vm710 = vcmp.gt.f32.partialorder %v709, %v665
    %v711 = vsel %vm710, 1.0, 0.0
    %v712 = vpack.c.bf16 %v711, %v711
    %s713 = scalar_lea.vmem [#allocation10], 48
    %v714 = vld [vmem:[%s713] sm:$0xff]
    %v715 = vld [vmem:[%s713 + $0x8] sm:$0xff]
    %716 = vmatprep.subr.bf16.mxu0 %v364
    %717 = vmatpush1.bf16.msra.mxu0 %v363
    %718 = vmatprep.subr.bf16.mxu0 %v366
    %719 = vmatpush1.bf16.msra.mxu0 %v365
    %720 = vmatprep.subr.bf16.mxu0 %v368
    %721 = vmatpush1.bf16.msra.mxu0 %v367
    %722 = vmatprep.subr.bf16.mxu0 %v370
    %723 = vmatpush1.bf16.msra.mxu0 %v369
    %724 = vmatprep.subr.bf16.mxu0 %v372
    %725 = vmatpush1.bf16.msra.mxu0 %v371
    %726 = vmatprep.subr.bf16.mxu0 %v374
    %727 = vmatpush1.bf16.msra.mxu0 %v373
    %728 = vmatprep.subr.bf16.mxu0 %v376
    %729 = vmatpush1.bf16.msra.mxu0 %v375
    %730 = vmatprep.subr.bf16.mxu0 %v378
    %731 = vmatpush1.bf16.msra.mxu0 %v377
    %732 = vmatprep.subr.bf16.mxu0 0
    %733 = vmatpush1.bf16.msra.mxu0 0
    %734 = vmatprep.subr.bf16.mxu0 0
    %735 = vmatpush1.bf16.msra.mxu0 0
    %736 = vmatprep.subr.bf16.mxu0 0
    %737 = vmatpush1.bf16.msra.mxu0 0
    %738 = vmatprep.subr.bf16.mxu0 0
    %739 = vmatpush1.bf16.msra.mxu0 0
    %740 = vmatprep.subr.bf16.mxu0 0
    %741 = vmatpush1.bf16.msra.mxu0 0
    %742 = vmatprep.subr.bf16.mxu0 0
    %743 = vmatpush1.bf16.msra.mxu0 0
    %744 = vmatprep.subr.bf16.mxu0 0
    %745 = vmatpush1.bf16.msra.mxu0 0
    %746 = vmatprep.subr.bf16.mxu0 0
    %747 = vmatpush1.bf16.msra.mxu0 0
    %748 = vmatprep.mubr.bf16.mxu0 0
    %749 = vmatmul.mubr.bf16.gmra.mrb[0].mxu0 %v712
    %v750 = vpop.f32.mrb[0].mxu0
    %v751 = vadd.f32 %v155, %v750
    %v752 = vpop.f32.mrb[0].mxu0
    %v753 = vadd.f32 %v159, %v752
    %v754 = vpop.f32.mrb[0].mxu0
    %v755 = vpop.f32.mrb[0].mxu0
    %756 = vdwg.mxu0
    %v757 = vmul.f32 %v751, 0.5
    %v758 = vmul.f32 %v753, 0.5
    %v759 = vtanh.pop %v757
    %v760 = vtanh.pop %v758
    %v761 = vadd.f32 %v759, 1.0
    %v762 = vadd.f32 %v760, 1.0
    %v763 = vmul.f32 %v761, 0.5
    %v764 = vmul.f32 %v762, 0.5
    %vm765 = vcmp.gt.f32.partialorder %v763, %v714
    %vm766 = vcmp.gt.f32.partialorder %v764, %v715
    %v767 = vsel %vm765, 1.0, 0.0
    %v768 = vsel %vm766, 1.0, 0.0
    %v769 = vpack.c.bf16 %v767, %v767
    %v770 = vpack.c.bf16 %v768, %v768
    %s771 = scalar_lea.vmem [#allocation8], 32
    %v772 = vld [vmem:[%s771] sm:$0xff]
    %773 = vmatprep.subr.bf16.mxu0 0
    %774 = vmatpush1.bf16.msra.mxu0 %v234
    %775 = vmatprep.subr.bf16.mxu0 0
    %776 = vmatpush1.bf16.msra.mxu0 %v235
    %777 = vmatprep.subr.bf16.mxu0 0
    %778 = vmatpush1.bf16.msra.mxu0 %v236
    %779 = vmatprep.subr.bf16.mxu0 0
    %780 = vmatpush1.bf16.msra.mxu0 %v237
    %781 = vmatprep.subr.bf16.mxu0 0
    %782 = vmatpush1.bf16.msra.mxu0 %v238
    %783 = vmatprep.subr.bf16.mxu0 0
    %784 = vmatpush1.bf16.msra.mxu0 %v239
    %785 = vmatprep.subr.bf16.mxu0 0
    %786 = vmatpush1.bf16.msra.mxu0 %v240
    %787 = vmatprep.subr.bf16.mxu0 0
    %788 = vmatpush1.bf16.msra.mxu0 %v241
    %789 = vmatprep.subr.bf16.mxu0 0
    %790 = vmatpush1.bf16.msra.mxu0 %v242
    %791 = vmatprep.subr.bf16.mxu0 0
    %792 = vmatpush1.bf16.msra.mxu0 %v243
    %793 = vmatprep.subr.bf16.mxu0 0
    %794 = vmatpush1.bf16.msra.mxu0 %v244
    %795 = vmatprep.subr.bf16.mxu0 0
    %796 = vmatpush1.bf16.msra.mxu0 %v245
    %797 = vmatprep.subr.bf16.mxu0 0
    %798 = vmatpush1.bf16.msra.mxu0 %v246
    %799 = vmatprep.subr.bf16.mxu0 0
    %800 = vmatpush1.bf16.msra.mxu0 %v247
    %801 = vmatprep.subr.bf16.mxu0 0
    %802 = vmatpush1.bf16.msra.mxu0 %v248
    %803 = vmatprep.subr.bf16.mxu0 0
    %804 = vmatpush1.bf16.msra.mxu0 %v249
    %805 = vmatprep.mubr.bf16.mxu0 %v770
    %806 = vmatmul.mubr.bf16.gmra.mrb[0].mxu0 %v769
    %v807 = vpop.f32.mrb[0].mxu0
    %v808 = vadd.f32 %v148, %v807
    %v809 = vpop.f32.mrb[0].mxu0
    %v810 = vpop.f32.mrb[0].mxu0
    %v811 = vpop.f32.mrb[0].mxu0
    %812 = vdwg.mxu0
    %v813 = vmul.f32 %v808, 0.5
    %v814 = vtanh.pop %v813
    %v815 = vadd.f32 %v814, 1.0
    %v816 = vmul.f32 %v815, 0.5
    %vm817 = vcmp.gt.f32.partialorder %v816, %v772
    %v818 = vsel %vm817, 1.0, 0.0
    %v819 = vpack.c.bf16 %v818, %v818
    %s820 = scalar_lea.vmem [#allocation10], 64
    %v821 = vld [vmem:[%s820] sm:$0xff]
    %v822 = vld [vmem:[%s820 + $0x8] sm:$0xff]
    %823 = vmatprep.subr.bf16.mxu0 %v364
    %824 = vmatpush1.bf16.msra.mxu0 %v363
    %825 = vmatprep.subr.bf16.mxu0 %v366
    %826 = vmatpush1.bf16.msra.mxu0 %v365
    %827 = vmatprep.subr.bf16.mxu0 %v368
    %828 = vmatpush1.bf16.msra.mxu0 %v367
    %829 = vmatprep.subr.bf16.mxu0 %v370
    %830 = vmatpush1.bf16.msra.mxu0 %v369
    %831 = vmatprep.subr.bf16.mxu0 %v372
    %832 = vmatpush1.bf16.msra.mxu0 %v371
    %833 = vmatprep.subr.bf16.mxu0 %v374
    %834 = vmatpush1.bf16.msra.mxu0 %v373
    %835 = vmatprep.subr.bf16.mxu0 %v376
    %836 = vmatpush1.bf16.msra.mxu0 %v375
    %837 = vmatprep.subr.bf16.mxu0 %v378
    %838 = vmatpush1.bf16.msra.mxu0 %v377
    %839 = vmatprep.subr.bf16.mxu0 0
    %840 = vmatpush1.bf16.msra.mxu0 0
    %841 = vmatprep.subr.bf16.mxu0 0
    %842 = vmatpush1.bf16.msra.mxu0 0
    %843 = vmatprep.subr.bf16.mxu0 0
    %844 = vmatpush1.bf16.msra.mxu0 0
    %845 = vmatprep.subr.bf16.mxu0 0
    %846 = vmatpush1.bf16.msra.mxu0 0
    %847 = vmatprep.subr.bf16.mxu0 0
    %848 = vmatpush1.bf16.msra.mxu0 0
    %849 = vmatprep.subr.bf16.mxu0 0
    %850 = vmatpush1.bf16.msra.mxu0 0
    %851 = vmatprep.subr.bf16.mxu0 0
    %852 = vmatpush1.bf16.msra.mxu0 0
    %853 = vmatprep.subr.bf16.mxu0 0
    %854 = vmatpush1.bf16.msra.mxu0 0
    %855 = vmatprep.mubr.bf16.mxu0 0
    %856 = vmatmul.mubr.bf16.gmra.mrb[0].mxu0 %v819
    %v857 = vpop.f32.mrb[0].mxu0
    %v858 = vadd.f32 %v155, %v857
    %v859 = vpop.f32.mrb[0].mxu0
    %v860 = vadd.f32 %v159, %v859
    %v861 = vpop.f32.mrb[0].mxu0
    %v862 = vpop.f32.mrb[0].mxu0
    %863 = vdwg.mxu0
    %v864 = vmul.f32 %v858, 0.5
    %v865 = vmul.f32 %v860, 0.5
    %v866 = vtanh.pop %v864
    %v867 = vtanh.pop %v865
    %v868 = vadd.f32 %v866, 1.0
    %v869 = vadd.f32 %v867, 1.0
    %v870 = vmul.f32 %v868, 0.5
    %v871 = vmul.f32 %v869, 0.5
    %vm872 = vcmp.gt.f32.partialorder %v870, %v821
    %vm873 = vcmp.gt.f32.partialorder %v871, %v822
    %v874 = vsel %vm872, 1.0, 0.0
    %v875 = vsel %vm873, 1.0, 0.0
    %v876 = vpack.c.bf16 %v874, %v874
    %v877 = vpack.c.bf16 %v875, %v875
    %v878 = vunpack.c.l.bf16 %v876
    %v879 = vunpack.c.l.bf16 %v877
    %880 = vst [vmem:[#allocation11] sm:$0xff] %v878
    %881 = vst [vmem:[#allocation11 + $0x8] sm:$0xff] %v879
    // Predicated region
    $region50: #{tpu_custom_call.1} parent=1 // pred_check
      _
    $region51: #{tpu_custom_call.1} parent=1 // pred_check_branch
      %883 = sbr.rel (0) target = $region53
    $region52: #{tpu_custom_call.1} parent=1 // pred_region
      %s885 = ssub.s32 256, 256
      %886 = vsyncadd [#allocation4], %s885
      %s888 = sshll.u32 [#allocation11], 4
      %s889 = int_to_ptr.vmem [resolvable:$true] %s888
      %891 = dma.vmem_to_hbm [thread:$0]  %s889, 256, %s7, [#allocation4]
    $region53: #{tpu_custom_call.1} parent=1 // pred_fallthru
      _
    // Predicated region
    $region54: #{tpu_custom_call.1} parent=1 // pred_check
      _
    $region55: #{tpu_custom_call.1} parent=1 // pred_check_branch
      %893 = sbr.rel (0) target = $region57
    $region56: #{tpu_custom_call.1} parent=1 // pred_region
      %894 = dma.done [#allocation4], 256
    $region57: #{tpu_custom_call.1} parent=1 // pred_fallthru
      _
    %895 = vsyncpa [#allocation3], 1
    %896 = vsyncpa [#allocation6], 1
    %897 = vsyncpa [#allocation9], 1
    %898 = vsyncpa [#allocation4], 1

</llo_original>
